<compile_context>
chip_gen: v6e
topology: v6e:2x2x1
jax: 0.10.0
libtpu: 0.0.40
codegen_flags: <defaults>
</compile_context>

<pallas_src>
import numpy as np
import jax
import jax.numpy as jnp
from jax.experimental import pallas as pl
from jax.experimental.pallas import tpu as pltpu

BN_EPS = 1e-5

# ---------------------------------------------------------------------------
# Synthetic "data_wrapper" (ontology / gene mapping), small but exercises all paths.
# ---------------------------------------------------------------------------
GENES = [f"g{i}" for i in range(6)]
GENE_ID = {g: i for i, g in enumerate(GENES)}
FEATURE_DIM = 8
HIDDEN = 4                                   # num_hiddens_genotype
TERM_DIRECT_GENE = {"T_a": [0, 1, 2], "T_b": [3, 4, 5], "T_c": [1, 4], "T_root": [0, 5]}
TERM_CHILDREN = {"T_a": [], "T_b": [], "T_c": ["T_a", "T_b"], "T_root": ["T_c"]}
TERM_LAYERS = [["T_a", "T_b"], ["T_c"], ["T_root"]]   # leaves first (topological)
ROOT = "T_root"
MIN_DROPOUT_LAYER = 1

G = len(GENES)
F = FEATURE_DIM
H = HIDDEN
N_LAYERS = len(TERM_LAYERS)

# ---------------------------------------------------------------------------
# Static COLUMN layout of the (B, 128) state / output slab:
#   [gene hiddens | direct-gene outputs | term hiddens (topo order) | aux | final | 0s]
# ---------------------------------------------------------------------------
DTERMS = list(TERM_DIRECT_GENE.keys())
D_OFFS = {}
_c = G
for _t in DTERMS:
    D_OFFS[_t] = _c
    _c += len(TERM_DIRECT_GENE[_t])
D_TOTAL = _c - G

TOPO_TERMS = [t for layer in TERM_LAYERS for t in layer]
T_OFFS = {t: G + D_TOTAL + i * H for i, t in enumerate(TOPO_TERMS)}
STATE_W = G + D_TOTAL + len(TOPO_TERMS) * H          # 32
AUX_COLS = {t: STATE_W + i for i, t in enumerate(TOPO_TERMS)}
FINAL_COL = STATE_W + len(TOPO_TERMS)                # 36
OUT_W = 128                                          # lane-dense slab width
assert FINAL_COL < OUT_W

# ---------------------------------------------------------------------------
# Static ROW layout of the single packed-parameter array (all offsets 8-aligned).
# ---------------------------------------------------------------------------
def _rup8(n):
    return ((n + 7) // 8) * 8

R_FEAT_W = 0                                   # (G*F, 128) block-diag gene feature weights
R_FEAT_V = _rup8(R_FEAT_W + G * F)             # 3 rows: feat bias / BN gamma / BN beta
R_DIR_W = _rup8(R_FEAT_V + 3)                  # (128, 128) direct-gene weights (rows = gene cols)
R_DIR_B = R_DIR_W + OUT_W                      # 1 row: direct-gene biases
R_LAYER_W, R_LAYER_V = [], []
_r = _rup8(R_DIR_B + 1)
for _l in range(N_LAYERS):
    R_LAYER_W.append(_r)                       # (128, 128) fused (sel @ wblk) layer weights
    R_LAYER_V.append(_r + OUT_W)               # 3 rows: bias / gamma / beta
    _r = _rup8(_r + OUT_W + 3)
R_HEAD_W = _r                                  # (128, 128) all aux heads + final head
R_HEAD_V = R_HEAD_W + OUT_W                    # 3 rows: a1b / a2w / a2b (incl. final scalars)
TOTAL_ROWS = _rup8(R_HEAD_V + 3)


# ---------------------------------------------------------------------------
# Single fused Pallas kernel: entire forward pass.  2 inputs, 1 output, 6 matmuls.
# ---------------------------------------------------------------------------
def _fused_kernel(x2_ref, w_ref, out_ref):
    def bn(y, gamma, beta):
        # training-mode BatchNorm: whole-batch biased statistics (per column)
        mean = jnp.mean(y, axis=0, keepdims=True)
        var = jnp.mean((y - mean) ** 2, axis=0, keepdims=True)
        return gamma * (y - mean) * jax.lax.rsqrt(var + BN_EPS) + beta

    # Stage A: all per-gene Linear(F->1) as one block-diag matmul -> tanh -> BN.
    # Outputs land at state columns [0, G); padding columns stay exactly zero.
    fw = w_ref[R_FEAT_W:R_FEAT_W + G * F, :]
    fv = w_ref[R_FEAT_V:R_FEAT_V + 3, :]
    y = jnp.tanh(jnp.dot(x2_ref[...], fw, preferred_element_type=jnp.float32) + fv[0:1])
    state = bn(y, fv[1:2], fv[2:3])                           # (B, 128)

    # Stage B: all direct-gene linears; outputs land at columns [G, G+D_TOTAL).
    dw = w_ref[R_DIR_W:R_DIR_W + OUT_W, :]
    db = w_ref[R_DIR_B:R_DIR_B + 1, :]
    state = state + jnp.dot(state, dw, preferred_element_type=jnp.float32) + db

    # Stage C: topological term layers.  Ontology wiring (child-hidden / direct-gene
    # concatenation) is folded into the packed weights: rows = state columns,
    # columns = this layer's term-hidden columns.  One matmul per layer.
    # TODO(synk): nn.Dropout (layers >= MIN_DROPOUT_LAYER) is eval-mode identity.
    for l in range(N_LAYERS):
        lw = w_ref[R_LAYER_W[l]:R_LAYER_W[l] + OUT_W, :]
        lv = w_ref[R_LAYER_V[l]:R_LAYER_V[l] + 3, :]
        z = jnp.tanh(jnp.dot(state, lw, preferred_element_type=jnp.float32) + lv[0:1])
        state = state + bn(z, lv[1:2], lv[2:3])               # disjoint-column add

    # Stage D: ALL aux heads + the final head as one matmul + one tanh + one FMA.
    hw = w_ref[R_HEAD_W:R_HEAD_W + OUT_W, :]
    hv = w_ref[R_HEAD_V:R_HEAD_V + 3, :]
    a1 = jnp.tanh(jnp.dot(state, hw, preferred_element_type=jnp.float32) + hv[0:1])
    out_ref[...] = state + a1 * hv[1:2] + hv[2:3]             # one unmasked 128-wide store


# ---------------------------------------------------------------------------
# Deterministic parameter init (shapes follow AdaSembPA.__init__)
# ---------------------------------------------------------------------------
def init_params(seed=0):
    rng = np.random.default_rng(seed)
    p = {}
    p["feat_w"] = rng.normal(0, 0.3, (G, F)).astype(np.float32)
    p["feat_b"] = rng.normal(0, 0.1, (1, G)).astype(np.float32)
    p["feat_gamma"] = np.ones((1, G), np.float32)      # BatchNorm1d(1) defaults
    p["feat_beta"] = np.zeros((1, G), np.float32)
    p["direct"] = {}
    for t, gs in TERM_DIRECT_GENE.items():
        p["direct"][t] = (rng.normal(0, 0.3, (G, len(gs))).astype(np.float32),
                          rng.normal(0, 0.1, (1, len(gs))).astype(np.float32))
    p["term"] = {}
    for layer in TERM_LAYERS:
        for t in layer:
            in_dim = H * len(TERM_CHILDREN[t]) + len(TERM_DIRECT_GENE.get(t, []))
            p["term"][t] = dict(
                w=rng.normal(0, 0.3, (in_dim, H)).astype(np.float32),
                b=rng.normal(0, 0.1, (1, H)).astype(np.float32),
                gamma=np.ones((1, H), np.float32),
                beta=np.zeros((1, H), np.float32),
                a1w=rng.normal(0, 0.3, (H, 1)).astype(np.float32),
                a1b=rng.normal(0, 0.1, (1, 1)).astype(np.float32),
                a2w=rng.normal(0, 0.3, (1, 1)).astype(np.float32),
                a2b=rng.normal(0, 0.1, (1, 1)).astype(np.float32),
            )
    p["final_w1"] = rng.normal(0, 0.3, (H, 1)).astype(np.float32)
    p["final_b1"] = rng.normal(0, 0.1, (1, 1)).astype(np.float32)
    p["final_w2"] = rng.normal(0, 0.3, (1, 1)).astype(np.float32)
    p["final_b2"] = rng.normal(0, 0.1, (1, 1)).astype(np.float32)
    return p


# ---------------------------------------------------------------------------
# One-time parameter packing (host numpy) into ONE (TOTAL_ROWS, 128) slab + upload.
# Ontology selection, block-diag packing, and head fusion all happen here.
# ---------------------------------------------------------------------------
def prepare_packed_params(params):
    Wp = np.zeros((TOTAL_ROWS, OUT_W), np.float32)

    # Gene feature layers: block-diagonal (G*F, G) -> columns [0, G)
    for i in range(G):
        Wp[R_FEAT_W + i * F:R_FEAT_W + (i + 1) * F, i] = params["feat_w"][i]
    Wp[R_FEAT_V + 0, :G] = params["feat_b"][0]
    Wp[R_FEAT_V + 1, :G] = params["feat_gamma"][0]
    Wp[R_FEAT_V + 2, :G] = params["feat_beta"][0]

    # Direct-gene linears: rows = gene columns [0, G), columns = D_OFFS[t]..
    for t in DTERMS:
        w, b = params["direct"][t]
        c0, n = D_OFFS[t], w.shape[1]
        Wp[R_DIR_W:R_DIR_W + G, c0:c0 + n] = w
        Wp[R_DIR_B, c0:c0 + n] = b[0]

    # Term layers: selection folded in (rows indexed by state-slab columns).
    for l, layer in enumerate(TERM_LAYERS):
        r0, v0 = R_LAYER_W[l], R_LAYER_V[l]
        for t in layer:
            tp = params["term"][t]
            c0 = T_OFFS[t]
            rr = 0
            for child in TERM_CHILDREN[t]:
                Wp[r0 + T_OFFS[child]:r0 + T_OFFS[child] + H, c0:c0 + H] = tp["w"][rr:rr + H]
                rr += H
            if t in TERM_DIRECT_GENE:
                nd = len(TERM_DIRECT_GENE[t])
                Wp[r0 + D_OFFS[t]:r0 + D_OFFS[t] + nd, c0:c0 + H] = tp["w"][rr:rr + nd]
                rr += nd
            Wp[v0 + 0, c0:c0 + H] = tp["b"][0]
            Wp[v0 + 1, c0:c0 + H] = tp["gamma"][0]
            Wp[v0 + 2, c0:c0 + H] = tp["beta"][0]

    # Aux heads (all terms) + final head, fused into one weight matrix.
    for t in TOPO_TERMS:
        tp = params["term"][t]
        c = AUX_COLS[t]
        Wp[R_HEAD_W + T_OFFS[t]:R_HEAD_W + T_OFFS[t] + H, c] = tp["a1w"][:, 0]
        Wp[R_HEAD_V + 0, c] = tp["a1b"][0, 0]
        Wp[R_HEAD_V + 1, c] = tp["a2w"][0, 0]
        Wp[R_HEAD_V + 2, c] = tp["a2b"][0, 0]
    Wp[R_HEAD_W + T_OFFS[ROOT]:R_HEAD_W + T_OFFS[ROOT] + H, FINAL_COL] = params["final_w1"][:, 0]
    Wp[R_HEAD_V + 0, FINAL_COL] = params["final_b1"][0, 0]
    Wp[R_HEAD_V + 1, FINAL_COL] = params["final_w2"][0, 0]
    Wp[R_HEAD_V + 2, FINAL_COL] = params["final_b2"][0, 0]

    return jnp.asarray(Wp)


# ---------------------------------------------------------------------------
# Jitted forward: one pallas_call (2 inputs), then cheap slicing of the output slab.
# ---------------------------------------------------------------------------
@jax.jit
def forward_pallas(w_packed, x):
    B = x.shape[0]
    x2 = x.reshape(B, G * F)                     # reshape done by XLA, outside kernel

    slab = pl.pallas_call(
        _fused_kernel,
        out_shape=jax.ShapeDtypeStruct((B, OUT_W), jnp.float32),
        in_specs=[pl.BlockSpec(memory_space=pltpu.MemorySpace.VMEM),
                  pl.BlockSpec(memory_space=pltpu.MemorySpace.VMEM)],
        out_specs=pl.BlockSpec(memory_space=pltpu.MemorySpace.VMEM),
        compiler_params=pltpu.CompilerParams(vmem_limit_bytes=32 * 1024 * 1024),
    )(x2, w_packed)

    hidden = {g: slab[:, i:i + 1] for g, i in GENE_ID.items()}
    aux = {}
    for t in TOPO_TERMS:
        hidden[t] = slab[:, T_OFFS[t]:T_OFFS[t] + H]
        aux[t] = slab[:, AUX_COLS[t]:AUX_COLS[t] + 1]
    aux["final"] = slab[:, FINAL_COL:FINAL_COL + 1]
    return aux, hidden


# ---------------------------------------------------------------------------
# Plain-numpy reference (mirrors the PyTorch per-term loops) for verification.
# ---------------------------------------------------------------------------
def forward_reference(params, x_np):
    def bn(y, gamma, beta):
        mean = y.mean(axis=0, keepdims=True)
        var = ((y - mean) ** 2).mean(axis=0, keepdims=True)
        return gamma * (y - mean) / np.sqrt(var + BN_EPS) + beta

    hidden, feat_list = {}, []
    for g, i in GENE_ID.items():
        y = np.tanh(x_np[:, i, :] @ params["feat_w"][i][:, None] + params["feat_b"][0, i])
        y = bn(y, params["feat_gamma"][:, i:i + 1], params["feat_beta"][:, i:i + 1])
        hidden[g] = y
        feat_list.append(y)
    gene_input = np.concatenate(feat_list, axis=1)
    direct = {t: gene_input @ w + b for t, (w, b) in params["direct"].items()}
    aux = {}
    for layer in TERM_LAYERS:
        for t in layer:
            pieces = [hidden[c] for c in TERM_CHILDREN[t]]
            if t in TERM_DIRECT_GENE:
                pieces.append(direct[t])
            ci = np.concatenate(pieces, axis=1)
            tp = params["term"][t]
            z = np.tanh(ci @ tp["w"] + tp["b"])
            h = bn(z, tp["gamma"], tp["beta"])
            hidden[t] = h
            a1 = np.tanh(h @ tp["a1w"] + tp["a1b"])
            aux[t] = a1 * tp["a2w"] + tp["a2b"]
    a1 = np.tanh(hidden[ROOT] @ params["final_w1"] + params["final_b1"])
    aux["final"] = a1 * params["final_w2"] + params["final_b2"]
    return aux, hidden


if __name__ == "__main__":
    B = 8    # small test batch; production callers should use B >= 256 per pallas_call
    key = jax.random.PRNGKey(0)
    x = jax.random.normal(key, (B, G, F), dtype=jnp.float32)

    params = init_params(0)
    w_packed = prepare_packed_params(params)     # one-time packing + device upload

    aux_out, hidden = forward_pallas(w_packed, x)
    jax.block_until_ready(aux_out["final"])

    aux_ref, hid_ref = forward_reference(params, np.asarray(x))
    for k in aux_ref:
        np.testing.assert_allclose(np.asarray(aux_out[k]), aux_ref[k], atol=3e-4, rtol=3e-4)
    for k in hid_ref:
        np.testing.assert_allclose(np.asarray(hidden[k]), hid_ref[k], atol=3e-4, rtol=3e-4)

    print("KERNEL_OK")
</pallas_src>

<mosaic_0001>
module attributes {stable_mosaic.version = 11 : i64} {
  func.func @_fused_kernel(%arg0: memref<8x48xf32, #tpu.memory_space<vmem>>, %arg1: memref<736x128xf32, #tpu.memory_space<vmem>>, %arg2: memref<8x128xf32, #tpu.memory_space<vmem>>) attributes {dimension_semantics = [], scalar_prefetch = 0 : i64, scratch_operands = 0 : i64, tpu.core_type = #tpu.core_type<tc>} {
    %c0 = arith.constant 0 : index
    %c0_0 = arith.constant 0 : index
    %0 = vector.load %arg1[%c0, %c0_0] : memref<736x128xf32, #tpu.memory_space<vmem>>, vector<48x128xf32>
    %c48 = arith.constant 48 : index
    %c0_1 = arith.constant 0 : index
    %1 = vector.load %arg1[%c48, %c0_1] : memref<736x128xf32, #tpu.memory_space<vmem>>, vector<3x128xf32>
    %c0_2 = arith.constant 0 : index
    %c0_3 = arith.constant 0 : index
    %2 = vector.load %arg0[%c0_2, %c0_3] : memref<8x48xf32, #tpu.memory_space<vmem>>, vector<8x48xf32>
    %cst = arith.constant dense<0.000000e+00> : vector<8x128xf32>
    %3 = tpu.matmul %2, %0, %cst {dimension_numbers = #tpu.dot_dimension_numbers<[1], [0], [0], [1], [0, 0, 1, 1], [], []>} : vector<8x48xf32>, vector<48x128xf32>, vector<8x128xf32> -> vector<8x128xf32>
    %4 = vector.extract_strided_slice %1 {offsets = [0, 0], sizes = [1, 128], strides = [1, 1]} : vector<3x128xf32> to vector<1x128xf32>
    %5 = vector.broadcast %4 : vector<1x128xf32> to vector<8x128xf32>
    %6 = arith.addf %3, %5 : vector<8x128xf32>
    %7 = math.tanh %6 : vector<8x128xf32>
    %8 = vector.extract_strided_slice %1 {offsets = [1, 0], sizes = [1, 128], strides = [1, 1]} : vector<3x128xf32> to vector<1x128xf32>
    %9 = vector.extract_strided_slice %1 {offsets = [2, 0], sizes = [1, 128], strides = [1, 1]} : vector<3x128xf32> to vector<1x128xf32>
    %cst_4 = arith.constant dense<0.000000e+00> : vector<128xf32>
    %10 = vector.multi_reduction <add>, %7, %cst_4 [0] : vector<8x128xf32> to vector<128xf32>
    %11 = vector.shape_cast %10 : vector<128xf32> to vector<1x128xf32>
    %cst_5 = arith.constant 8.000000e+00 : f32
    %12 = vector.broadcast %cst_5 : f32 to vector<1x128xf32>
    %13 = arith.divf %11, %12 : vector<1x128xf32>
    %14 = vector.broadcast %13 : vector<1x128xf32> to vector<8x128xf32>
    %15 = arith.subf %7, %14 : vector<8x128xf32>
    %16 = arith.mulf %15, %15 : vector<8x128xf32>
    %cst_6 = arith.constant dense<0.000000e+00> : vector<128xf32>
    %17 = vector.multi_reduction <add>, %16, %cst_6 [0] : vector<8x128xf32> to vector<128xf32>
    %18 = vector.shape_cast %17 : vector<128xf32> to vector<1x128xf32>
    %cst_7 = arith.constant 8.000000e+00 : f32
    %19 = vector.broadcast %cst_7 : f32 to vector<1x128xf32>
    %20 = arith.divf %18, %19 : vector<1x128xf32>
    %21 = vector.broadcast %13 : vector<1x128xf32> to vector<8x128xf32>
    %22 = arith.subf %7, %21 : vector<8x128xf32>
    %23 = vector.broadcast %8 : vector<1x128xf32> to vector<8x128xf32>
    %24 = arith.mulf %23, %22 : vector<8x128xf32>
    %cst_8 = arith.constant 9.99999974E-6 : f32
    %25 = vector.broadcast %cst_8 : f32 to vector<1x128xf32>
    %26 = arith.addf %20, %25 : vector<1x128xf32>
    %27 = math.rsqrt %26 : vector<1x128xf32>
    %28 = vector.broadcast %27 : vector<1x128xf32> to vector<8x128xf32>
    %29 = arith.mulf %24, %28 : vector<8x128xf32>
    %30 = vector.broadcast %9 : vector<1x128xf32> to vector<8x128xf32>
    %31 = arith.addf %29, %30 : vector<8x128xf32>
    %c56 = arith.constant 56 : index
    %c0_9 = arith.constant 0 : index
    %32 = vector.load %arg1[%c56, %c0_9] : memref<736x128xf32, #tpu.memory_space<vmem>>, vector<128x128xf32>
    %c184 = arith.constant 184 : index
    %c0_10 = arith.constant 0 : index
    %33 = vector.load %arg1[%c184, %c0_10] : memref<736x128xf32, #tpu.memory_space<vmem>>, vector<1x128xf32>
    %cst_11 = arith.constant dense<0.000000e+00> : vector<8x128xf32>
    %34 = tpu.matmul %31, %32, %cst_11 {dimension_numbers = #tpu.dot_dimension_numbers<[1], [0], [0], [1], [0, 0, 1, 1], [], []>} : vector<8x128xf32>, vector<128x128xf32>, vector<8x128xf32> -> vector<8x128xf32>
    %35 = arith.addf %31, %34 : vector<8x128xf32>
    %36 = vector.broadcast %33 : vector<1x128xf32> to vector<8x128xf32>
    %37 = arith.addf %35, %36 : vector<8x128xf32>
    %c192 = arith.constant 192 : index
    %c0_12 = arith.constant 0 : index
    %38 = vector.load %arg1[%c192, %c0_12] : memref<736x128xf32, #tpu.memory_space<vmem>>, vector<128x128xf32>
    %c320 = arith.constant 320 : index
    %c0_13 = arith.constant 0 : index
    %39 = vector.load %arg1[%c320, %c0_13] : memref<736x128xf32, #tpu.memory_space<vmem>>, vector<3x128xf32>
    %cst_14 = arith.constant dense<0.000000e+00> : vector<8x128xf32>
    %40 = tpu.matmul %37, %38, %cst_14 {dimension_numbers = #tpu.dot_dimension_numbers<[1], [0], [0], [1], [0, 0, 1, 1], [], []>} : vector<8x128xf32>, vector<128x128xf32>, vector<8x128xf32> -> vector<8x128xf32>
    %41 = vector.extract_strided_slice %39 {offsets = [0, 0], sizes = [1, 128], strides = [1, 1]} : vector<3x128xf32> to vector<1x128xf32>
    %42 = vector.broadcast %41 : vector<1x128xf32> to vector<8x128xf32>
    %43 = arith.addf %40, %42 : vector<8x128xf32>
    %44 = math.tanh %43 : vector<8x128xf32>
    %45 = vector.extract_strided_slice %39 {offsets = [1, 0], sizes = [1, 128], strides = [1, 1]} : vector<3x128xf32> to vector<1x128xf32>
    %46 = vector.extract_strided_slice %39 {offsets = [2, 0], sizes = [1, 128], strides = [1, 1]} : vector<3x128xf32> to vector<1x128xf32>
    %cst_15 = arith.constant dense<0.000000e+00> : vector<128xf32>
    %47 = vector.multi_reduction <add>, %44, %cst_15 [0] : vector<8x128xf32> to vector<128xf32>
    %48 = vector.shape_cast %47 : vector<128xf32> to vector<1x128xf32>
    %cst_16 = arith.constant 8.000000e+00 : f32
    %49 = vector.broadcast %cst_16 : f32 to vector<1x128xf32>
    %50 = arith.divf %48, %49 : vector<1x128xf32>
    %51 = vector.broadcast %50 : vector<1x128xf32> to vector<8x128xf32>
    %52 = arith.subf %44, %51 : vector<8x128xf32>
    %53 = arith.mulf %52, %52 : vector<8x128xf32>
    %cst_17 = arith.constant dense<0.000000e+00> : vector<128xf32>
    %54 = vector.multi_reduction <add>, %53, %cst_17 [0] : vector<8x128xf32> to vector<128xf32>
    %55 = vector.shape_cast %54 : vector<128xf32> to vector<1x128xf32>
    %cst_18 = arith.constant 8.000000e+00 : f32
    %56 = vector.broadcast %cst_18 : f32 to vector<1x128xf32>
    %57 = arith.divf %55, %56 : vector<1x128xf32>
    %58 = vector.broadcast %50 : vector<1x128xf32> to vector<8x128xf32>
    %59 = arith.subf %44, %58 : vector<8x128xf32>
    %60 = vector.broadcast %45 : vector<1x128xf32> to vector<8x128xf32>
    %61 = arith.mulf %60, %59 : vector<8x128xf32>
    %cst_19 = arith.constant 9.99999974E-6 : f32
    %62 = vector.broadcast %cst_19 : f32 to vector<1x128xf32>
    %63 = arith.addf %57, %62 : vector<1x128xf32>
    %64 = math.rsqrt %63 : vector<1x128xf32>
    %65 = vector.broadcast %64 : vector<1x128xf32> to vector<8x128xf32>
    %66 = arith.mulf %61, %65 : vector<8x128xf32>
    %67 = vector.broadcast %46 : vector<1x128xf32> to vector<8x128xf32>
    %68 = arith.addf %66, %67 : vector<8x128xf32>
    %69 = arith.addf %37, %68 : vector<8x128xf32>
    %c328 = arith.constant 328 : index
    %c0_20 = arith.constant 0 : index
    %70 = vector.load %arg1[%c328, %c0_20] : memref<736x128xf32, #tpu.memory_space<vmem>>, vector<128x128xf32>
    %c456 = arith.constant 456 : index
    %c0_21 = arith.constant 0 : index
    %71 = vector.load %arg1[%c456, %c0_21] : memref<736x128xf32, #tpu.memory_space<vmem>>, vector<3x128xf32>
    %cst_22 = arith.constant dense<0.000000e+00> : vector<8x128xf32>
    %72 = tpu.matmul %69, %70, %cst_22 {dimension_numbers = #tpu.dot_dimension_numbers<[1], [0], [0], [1], [0, 0, 1, 1], [], []>} : vector<8x128xf32>, vector<128x128xf32>, vector<8x128xf32> -> vector<8x128xf32>
    %73 = vector.extract_strided_slice %71 {offsets = [0, 0], sizes = [1, 128], strides = [1, 1]} : vector<3x128xf32> to vector<1x128xf32>
    %74 = vector.broadcast %73 : vector<1x128xf32> to vector<8x128xf32>
    %75 = arith.addf %72, %74 : vector<8x128xf32>
    %76 = math.tanh %75 : vector<8x128xf32>
    %77 = vector.extract_strided_slice %71 {offsets = [1, 0], sizes = [1, 128], strides = [1, 1]} : vector<3x128xf32> to vector<1x128xf32>
    %78 = vector.extract_strided_slice %71 {offsets = [2, 0], sizes = [1, 128], strides = [1, 1]} : vector<3x128xf32> to vector<1x128xf32>
    %cst_23 = arith.constant dense<0.000000e+00> : vector<128xf32>
    %79 = vector.multi_reduction <add>, %76, %cst_23 [0] : vector<8x128xf32> to vector<128xf32>
    %80 = vector.shape_cast %79 : vector<128xf32> to vector<1x128xf32>
    %cst_24 = arith.constant 8.000000e+00 : f32
    %81 = vector.broadcast %cst_24 : f32 to vector<1x128xf32>
    %82 = arith.divf %80, %81 : vector<1x128xf32>
    %83 = vector.broadcast %82 : vector<1x128xf32> to vector<8x128xf32>
    %84 = arith.subf %76, %83 : vector<8x128xf32>
    %85 = arith.mulf %84, %84 : vector<8x128xf32>
    %cst_25 = arith.constant dense<0.000000e+00> : vector<128xf32>
    %86 = vector.multi_reduction <add>, %85, %cst_25 [0] : vector<8x128xf32> to vector<128xf32>
    %87 = vector.shape_cast %86 : vector<128xf32> to vector<1x128xf32>
    %cst_26 = arith.constant 8.000000e+00 : f32
    %88 = vector.broadcast %cst_26 : f32 to vector<1x128xf32>
    %89 = arith.divf %87, %88 : vector<1x128xf32>
    %90 = vector.broadcast %82 : vector<1x128xf32> to vector<8x128xf32>
    %91 = arith.subf %76, %90 : vector<8x128xf32>
    %92 = vector.broadcast %77 : vector<1x128xf32> to vector<8x128xf32>
    %93 = arith.mulf %92, %91 : vector<8x128xf32>
    %cst_27 = arith.constant 9.99999974E-6 : f32
    %94 = vector.broadcast %cst_27 : f32 to vector<1x128xf32>
    %95 = arith.addf %89, %94 : vector<1x128xf32>
    %96 = math.rsqrt %95 : vector<1x128xf32>
    %97 = vector.broadcast %96 : vector<1x128xf32> to vector<8x128xf32>
    %98 = arith.mulf %93, %97 : vector<8x128xf32>
    %99 = vector.broadcast %78 : vector<1x128xf32> to vector<8x128xf32>
    %100 = arith.addf %98, %99 : vector<8x128xf32>
    %101 = arith.addf %69, %100 : vector<8x128xf32>
    %c464 = arith.constant 464 : index
    %c0_28 = arith.constant 0 : index
    %102 = vector.load %arg1[%c464, %c0_28] : memref<736x128xf32, #tpu.memory_space<vmem>>, vector<128x128xf32>
    %c592 = arith.constant 592 : index
    %c0_29 = arith.constant 0 : index
    %103 = vector.load %arg1[%c592, %c0_29] : memref<736x128xf32, #tpu.memory_space<vmem>>, vector<3x128xf32>
    %cst_30 = arith.constant dense<0.000000e+00> : vector<8x128xf32>
    %104 = tpu.matmul %101, %102, %cst_30 {dimension_numbers = #tpu.dot_dimension_numbers<[1], [0], [0], [1], [0, 0, 1, 1], [], []>} : vector<8x128xf32>, vector<128x128xf32>, vector<8x128xf32> -> vector<8x128xf32>
    %105 = vector.extract_strided_slice %103 {offsets = [0, 0], sizes = [1, 128], strides = [1, 1]} : vector<3x128xf32> to vector<1x128xf32>
    %106 = vector.broadcast %105 : vector<1x128xf32> to vector<8x128xf32>
    %107 = arith.addf %104, %106 : vector<8x128xf32>
    %108 = math.tanh %107 : vector<8x128xf32>
    %109 = vector.extract_strided_slice %103 {offsets = [1, 0], sizes = [1, 128], strides = [1, 1]} : vector<3x128xf32> to vector<1x128xf32>
    %110 = vector.extract_strided_slice %103 {offsets = [2, 0], sizes = [1, 128], strides = [1, 1]} : vector<3x128xf32> to vector<1x128xf32>
    %cst_31 = arith.constant dense<0.000000e+00> : vector<128xf32>
    %111 = vector.multi_reduction <add>, %108, %cst_31 [0] : vector<8x128xf32> to vector<128xf32>
    %112 = vector.shape_cast %111 : vector<128xf32> to vector<1x128xf32>
    %cst_32 = arith.constant 8.000000e+00 : f32
    %113 = vector.broadcast %cst_32 : f32 to vector<1x128xf32>
    %114 = arith.divf %112, %113 : vector<1x128xf32>
    %115 = vector.broadcast %114 : vector<1x128xf32> to vector<8x128xf32>
    %116 = arith.subf %108, %115 : vector<8x128xf32>
    %117 = arith.mulf %116, %116 : vector<8x128xf32>
    %cst_33 = arith.constant dense<0.000000e+00> : vector<128xf32>
    %118 = vector.multi_reduction <add>, %117, %cst_33 [0] : vector<8x128xf32> to vector<128xf32>
    %119 = vector.shape_cast %118 : vector<128xf32> to vector<1x128xf32>
    %cst_34 = arith.constant 8.000000e+00 : f32
    %120 = vector.broadcast %cst_34 : f32 to vector<1x128xf32>
    %121 = arith.divf %119, %120 : vector<1x128xf32>
    %122 = vector.broadcast %114 : vector<1x128xf32> to vector<8x128xf32>
    %123 = arith.subf %108, %122 : vector<8x128xf32>
    %124 = vector.broadcast %109 : vector<1x128xf32> to vector<8x128xf32>
    %125 = arith.mulf %124, %123 : vector<8x128xf32>
    %cst_35 = arith.constant 9.99999974E-6 : f32
    %126 = vector.broadcast %cst_35 : f32 to vector<1x128xf32>
    %127 = arith.addf %121, %126 : vector<1x128xf32>
    %128 = math.rsqrt %127 : vector<1x128xf32>
    %129 = vector.broadcast %128 : vector<1x128xf32> to vector<8x128xf32>
    %130 = arith.mulf %125, %129 : vector<8x128xf32>
    %131 = vector.broadcast %110 : vector<1x128xf32> to vector<8x128xf32>
    %132 = arith.addf %130, %131 : vector<8x128xf32>
    %133 = arith.addf %101, %132 : vector<8x128xf32>
    %c600 = arith.constant 600 : index
    %c0_36 = arith.constant 0 : index
    %134 = vector.load %arg1[%c600, %c0_36] : memref<736x128xf32, #tpu.memory_space<vmem>>, vector<128x128xf32>
    %c728 = arith.constant 728 : index
    %c0_37 = arith.constant 0 : index
    %135 = vector.load %arg1[%c728, %c0_37] : memref<736x128xf32, #tpu.memory_space<vmem>>, vector<3x128xf32>
    %cst_38 = arith.constant dense<0.000000e+00> : vector<8x128xf32>
    %136 = tpu.matmul %133, %134, %cst_38 {dimension_numbers = #tpu.dot_dimension_numbers<[1], [0], [0], [1], [0, 0, 1, 1], [], []>} : vector<8x128xf32>, vector<128x128xf32>, vector<8x128xf32> -> vector<8x128xf32>
    %137 = vector.extract_strided_slice %135 {offsets = [0, 0], sizes = [1, 128], strides = [1, 1]} : vector<3x128xf32> to vector<1x128xf32>
    %138 = vector.broadcast %137 : vector<1x128xf32> to vector<8x128xf32>
    %139 = arith.addf %136, %138 : vector<8x128xf32>
    %140 = math.tanh %139 : vector<8x128xf32>
    %141 = vector.extract_strided_slice %135 {offsets = [1, 0], sizes = [1, 128], strides = [1, 1]} : vector<3x128xf32> to vector<1x128xf32>
    %142 = vector.broadcast %141 : vector<1x128xf32> to vector<8x128xf32>
    %143 = arith.mulf %140, %142 : vector<8x128xf32>
    %144 = arith.addf %133, %143 : vector<8x128xf32>
    %145 = vector.extract_strided_slice %135 {offsets = [2, 0], sizes = [1, 128], strides = [1, 1]} : vector<3x128xf32> to vector<1x128xf32>
    %146 = vector.broadcast %145 : vector<1x128xf32> to vector<8x128xf32>
    %147 = arith.addf %144, %146 : vector<8x128xf32>
    %c0_39 = arith.constant 0 : index
    %c0_40 = arith.constant 0 : index
    %148 = vector.load %arg2[%c0_39, %c0_40] : memref<8x128xf32, #tpu.memory_space<vmem>>, vector<8x128xf32>
    tpu.vector_store %arg2[%c0_39, %c0_40], %147 {strides = array<i32>} : memref<8x128xf32, #tpu.memory_space<vmem>>, vector<8x128xf32>,
    return
  }
}

</mosaic_0001>

<llo_original>
// kernel: forward_pallas.1
$region0: #{forward_pallas.1}
  #allocation0 [shape = 'u32[]', space=smem, size = 0x4, offset = 0x4, fixed_abs, tag = 'smem constant byte address 0x4 - core index']
  #allocation1 [shape = 'u32[144,128]{1,0:T(1,128)}', space=vmem, size = 0x12000, scoped, tag = 'internal scratch']
  %s0 = inlined_call_operand.vmem [shape: f32[8,48], index: 0, kind: input, shape index: {}]
  %s1 = inlined_call_operand.hbm [shape: f32[736,128], index: 1, kind: input, shape index: {}]
  %s2 = inlined_call_operand.vmem [shape: f32[8,128], index: 2, kind: output, shape index: {}]
  %s3 = sld [smem:[#allocation0]]
  $region22: #{forward_pallas.1} parent=0
    _
  %s5 = ssub.s32 1, %s3
  %s6 = scalar_select 0, %s5, %s3
  $region1: #{forward_pallas.1} parent=0
    #allocation2 [shape = 'u8[376832]{0}', space=vmem, size = 0x5c000, scoped, tag = 'input window, operand 1, single buffered']
    #allocation3 [shape = 's32[1]{0}', space=sflag, size = 0x4, scoped, tag = 'scoped memory for forward_pallas.1']
    %7 = vsyncpa [#allocation3], 0
    // Predicated region
    $region2: #{forward_pallas.1} parent=1 // pred_check
      _
    $region3: #{forward_pallas.1} parent=1 // pred_check_branch
      %9 = sbr.rel (0) target = $region5
    $region4: #{forward_pallas.1} parent=1 // pred_region
      _
    $region5: #{forward_pallas.1} parent=1 // pred_fallthru
      _
    // Predicated region
    $region6: #{forward_pallas.1} parent=1 // pred_check
      _
    $region7: #{forward_pallas.1} parent=1 // pred_check_branch
      %11 = sbr.rel (0) target = $region9
    $region8: #{forward_pallas.1} parent=1 // pred_region
      %s13 = ssub.s32 11776, 11776
      %14 = vsyncadd [#allocation3], %s13
      %s15 = sshll.u32 [#allocation2], 4
      %s16 = int_to_ptr.vmem [resolvable:$true] %s15
      %21 = dma.hbm_to_vmem [thread:$0]  %s1, 11776, %s16, [#allocation3], 128, 128, 8
    $region9: #{forward_pallas.1} parent=1 // pred_fallthru
      _
    // Predicated region
    $region10: #{forward_pallas.1} parent=1 // pred_check
      _
    $region11: #{forward_pallas.1} parent=1 // pred_check_branch
      %23 = sbr.rel (0) target = $region13
    $region12: #{forward_pallas.1} parent=1 // pred_region
      %24 = dma.done [#allocation3], 11776
    $region13: #{forward_pallas.1} parent=1 // pred_fallthru
      _
    %v25 = vld [vmem:[#allocation2] sm:$0xff]
    %v26 = vld [vmem:[#allocation2 + $0x8] sm:$0xff]
    %v27 = vld [vmem:[#allocation2 + $0x10] sm:$0xff]
    %v28 = vld [vmem:[#allocation2 + $0x18] sm:$0xff]
    %v29 = vld [vmem:[#allocation2 + $0x20] sm:$0xff]
    %v30 = vld [vmem:[#allocation2 + $0x28] sm:$0xff]
    %v31 = vld [vmem:[#allocation2 + $0x30] sm:$0x7]
    %v32 = vld [vmem:[%s0] sm:$0xff]
    %v33 = vlaneseq
    %v34 = vshrl.u32 %v33, 7
    %v35 = vsub.s32 0, %v34
    %v36 = vrot.slane %v31, %v35
    %vm37 = vcmask 392192
    %v39 = vsel %vm37, %v32, 0
    %41 = vmatprep.subr.mxu0 0.0
    %42 = vmatpush1.msra.mxu0 0.0
    %43 = vmatprep.subr.mxu0 0.0
    %44 = vmatpush1.msra.mxu0 0.0
    %45 = vmatprep.subr.mxu0 0.0
    %46 = vmatpush1.msra.mxu0 0.0
    %47 = vmatprep.subr.mxu0 0.0
    %48 = vmatpush1.msra.mxu0 0.0
    %49 = vmatprep.subr.mxu0 0.0
    %50 = vmatpush1.msra.mxu0 0.0
    %51 = vmatprep.subr.mxu0 0.0
    %52 = vmatpush1.msra.mxu0 0.0
    %53 = vmatprep.subr.mxu0 0.0
    %54 = vmatpush1.msra.mxu0 0.0
    %55 = vmatprep.subr.mxu0 0.0
    %56 = vmatpush1.msra.mxu0 0.0
    %57 = vmatprep.subr.mxu0 0.0
    %58 = vmatpush1.msra.mxu0 0.0
    %59 = vmatprep.subr.mxu0 0.0
    %60 = vmatpush1.msra.mxu0 0.0
    %61 = vmatprep.subr.mxu0 0.0
    %62 = vmatpush1.msra.mxu0 %v30
    %63 = vmatprep.subr.mxu0 0.0
    %64 = vmatpush1.msra.mxu0 %v29
    %65 = vmatprep.subr.mxu0 0.0
    %66 = vmatpush1.msra.mxu0 %v28
    %67 = vmatprep.subr.mxu0 0.0
    %68 = vmatpush1.msra.mxu0 %v27
    %69 = vmatprep.subr.mxu0 0.0
    %70 = vmatpush1.msra.mxu0 %v26
    %71 = vmatprep.subr.mxu0 0.0
    %72 = vmatpush1.msra.mxu0 %v25
    %73 = vmatprep.subr.mxu0 0.0
    %74 = vmatpush2.msra.mxu0 0.0
    %75 = vmatprep.subr.mxu0 0.0
    %76 = vmatpush2.msra.mxu0 0.0
    %77 = vmatprep.subr.mxu0 0.0
    %78 = vmatpush2.msra.mxu0 0.0
    %79 = vmatprep.subr.mxu0 0.0
    %80 = vmatpush2.msra.mxu0 0.0
    %81 = vmatprep.subr.mxu0 0.0
    %82 = vmatpush2.msra.mxu0 0.0
    %83 = vmatprep.subr.mxu0 0.0
    %84 = vmatpush2.msra.mxu0 0.0
    %85 = vmatprep.subr.mxu0 0.0
    %86 = vmatpush2.msra.mxu0 0.0
    %87 = vmatprep.subr.mxu0 0.0
    %88 = vmatpush2.msra.mxu0 0.0
    %89 = vmatprep.subr.mxu0 0.0
    %90 = vmatpush2.msra.mxu0 0.0
    %91 = vmatprep.subr.mxu0 0.0
    %92 = vmatpush2.msra.mxu0 0.0
    %93 = vmatprep.subr.mxu0 0.0
    %94 = vmatpush2.msra.mxu0 0.0
    %95 = vmatprep.subr.mxu0 0.0
    %96 = vmatpush2.msra.mxu0 0.0
    %97 = vmatprep.subr.mxu0 0.0
    %98 = vmatpush2.msra.mxu0 0.0
    %99 = vmatprep.subr.mxu0 0.0
    %100 = vmatpush2.msra.mxu0 0.0
    %101 = vmatprep.subr.mxu0 0.0
    %102 = vmatpush2.msra.mxu0 0.0
    %103 = vmatprep.subr.mxu0 0.0
    %104 = vmatpush2.msra.mxu0 0.0
    %105 = vmatprep.mubr.f32.mxu0 0.0
    %106 = vmatmul.mubr.f32.gmra.mxu0 %v39
    %v107 = vpop.f32.mrf.mxu0
    %v108 = vadd.f32 %v36, %v107
    %v109 = vpop.f32.mrf.mxu0
    %110 = vdwg.mxu0
    %v111 = vtanh.pop %v108
    %v112 = vrot.slane %v111, 4
    %v113 = vadd.f32 %v111, %v112
    %v114 = vrot.slane %v113, 2
    %v115 = vadd.f32 %v113, %v114
    %v116 = vrot.slane %v115, 1
    %v117 = vadd.f32 %v115, %v116
    %v118 = vrcp.pop 8.0
    %v119 = vmul.f32 %v117, %v118
    %v120 = vsub.f32 %v111, %v119
    %v121 = vmul.f32 %v120, %v120
    %v122 = vrot.slane %v121, 4
    %v123 = vadd.f32 %v121, %v122
    %v124 = vrot.slane %v123, 2
    %v125 = vadd.f32 %v123, %v124
    %v126 = vrot.slane %v125, 1
    %v127 = vadd.f32 %v125, %v126
    %v128 = vmul.f32 %v127, %v118
    %v129 = vlaneseq
    %v130 = vshrl.u32 %v129, 7
    %v131 = vsub.s32 1, %v130
    %v132 = vrot.slane %v31, %v131
    %v133 = vmul.f32 %v132, %v120
    %v134 = vadd.f32 %v128, 1e-05
    %v135 = vrsqrt.pop %v134
    %v136 = vmul.f32 %v133, %v135
    %v137 = vlaneseq
    %v138 = vshrl.u32 %v137, 7
    %v139 = vsub.s32 2, %v138
    %v140 = vrot.slane %v31, %v139
    %v141 = vadd.f32 %v136, %v140
    %v142 = vld [vmem:[#allocation2 + $0x38] sm:$0xff]
    %v143 = vld [vmem:[#allocation2 + $0x40] sm:$0xff]
    %v144 = vld [vmem:[#allocation2 + $0x48] sm:$0xff]
    %v145 = vld [vmem:[#allocation2 + $0x50] sm:$0xff]
    %v146 = vld [vmem:[#allocation2 + $0x58] sm:$0xff]
    %v147 = vld [vmem:[#allocation2 + $0x60] sm:$0xff]
    %v148 = vld [vmem:[#allocation2 + $0x68] sm:$0xff]
    %v149 = vld [vmem:[#allocation2 + $0x70] sm:$0xff]
    %v150 = vld [vmem:[#allocation2 + $0x78] sm:$0xff]
    %v151 = vld [vmem:[#allocation2 + $0x80] sm:$0xff]
    %v152 = vld [vmem:[#allocation2 + $0x88] sm:$0xff]
    %v153 = vld [vmem:[#allocation2 + $0x90] sm:$0xff]
    %v154 = vld [vmem:[#allocation2 + $0x98] sm:$0xff]
    %v155 = vld [vmem:[#allocation2 + $0xa0] sm:$0xff]
    %v156 = vld [vmem:[#allocation2 + $0xa8] sm:$0xff]
    %v157 = vld [vmem:[#allocation2 + $0xb0] sm:$0xff]
    %v158 = vld [vmem:[#allocation2 + $0xb8] sm:$0x1]
    %159 = vmatprep.subr.mxu0 0.0
    %160 = vmatpush1.msra.mxu0 %v157
    %161 = vmatprep.subr.mxu0 0.0
    %162 = vmatpush1.msra.mxu0 %v156
    %163 = vmatprep.subr.mxu0 0.0
    %164 = vmatpush1.msra.mxu0 %v155
    %165 = vmatprep.subr.mxu0 0.0
    %166 = vmatpush1.msra.mxu0 %v154
    %167 = vmatprep.subr.mxu0 0.0
    %168 = vmatpush1.msra.mxu0 %v153
    %169 = vmatprep.subr.mxu0 0.0
    %170 = vmatpush1.msra.mxu0 %v152
    %171 = vmatprep.subr.mxu0 0.0
    %172 = vmatpush1.msra.mxu0 %v151
    %173 = vmatprep.subr.mxu0 0.0
    %174 = vmatpush1.msra.mxu0 %v150
    %175 = vmatprep.subr.mxu0 0.0
    %176 = vmatpush1.msra.mxu0 %v149
    %177 = vmatprep.subr.mxu0 0.0
    %178 = vmatpush1.msra.mxu0 %v148
    %179 = vmatprep.subr.mxu0 0.0
    %180 = vmatpush1.msra.mxu0 %v147
    %181 = vmatprep.subr.mxu0 0.0
    %182 = vmatpush1.msra.mxu0 %v146
    %183 = vmatprep.subr.mxu0 0.0
    %184 = vmatpush1.msra.mxu0 %v145
    %185 = vmatprep.subr.mxu0 0.0
    %186 = vmatpush1.msra.mxu0 %v144
    %187 = vmatprep.subr.mxu0 0.0
    %188 = vmatpush1.msra.mxu0 %v143
    %189 = vmatprep.subr.mxu0 0.0
    %190 = vmatpush1.msra.mxu0 %v142
    %191 = vmatprep.subr.mxu0 0.0
    %192 = vmatpush2.msra.mxu0 0.0
    %193 = vmatprep.subr.mxu0 0.0
    %194 = vmatpush2.msra.mxu0 0.0
    %195 = vmatprep.subr.mxu0 0.0
    %196 = vmatpush2.msra.mxu0 0.0
    %197 = vmatprep.subr.mxu0 0.0
    %198 = vmatpush2.msra.mxu0 0.0
    %199 = vmatprep.subr.mxu0 0.0
    %200 = vmatpush2.msra.mxu0 0.0
    %201 = vmatprep.subr.mxu0 0.0
    %202 = vmatpush2.msra.mxu0 0.0
    %203 = vmatprep.subr.mxu0 0.0
    %204 = vmatpush2.msra.mxu0 0.0
    %205 = vmatprep.subr.mxu0 0.0
    %206 = vmatpush2.msra.mxu0 0.0
    %207 = vmatprep.subr.mxu0 0.0
    %208 = vmatpush2.msra.mxu0 0.0
    %209 = vmatprep.subr.mxu0 0.0
    %210 = vmatpush2.msra.mxu0 0.0
    %211 = vmatprep.subr.mxu0 0.0
    %212 = vmatpush2.msra.mxu0 0.0
    %213 = vmatprep.subr.mxu0 0.0
    %214 = vmatpush2.msra.mxu0 0.0
    %215 = vmatprep.subr.mxu0 0.0
    %216 = vmatpush2.msra.mxu0 0.0
    %217 = vmatprep.subr.mxu0 0.0
    %218 = vmatpush2.msra.mxu0 0.0
    %219 = vmatprep.subr.mxu0 0.0
    %220 = vmatpush2.msra.mxu0 0.0
    %221 = vmatprep.subr.mxu0 0.0
    %222 = vmatpush2.msra.mxu0 0.0
    %223 = vmatprep.mubr.f32.mxu0 0.0
    %224 = vmatmul.mubr.f32.gmra.mxu0 %v141
    %v225 = vpop.f32.mrf.mxu0
    %v226 = vadd.f32 0.0, %v225
    %v227 = vpop.f32.mrf.mxu0
    %228 = vdwg.mxu0
    %v229 = vadd.f32 %v141, %v226
    %v230 = vlaneseq
    %v231 = vshrl.u32 %v230, 7
    %v232 = vsub.s32 0, %v231
    %v233 = vrot.slane %v158, %v232
    %v234 = vadd.f32 %v229, %v233
    %v235 = vld [vmem:[#allocation2 + $0xc0] sm:$0xff]
    %v236 = vld [vmem:[#allocation2 + $0xc8] sm:$0xff]
    %v237 = vld [vmem:[#allocation2 + $0xd0] sm:$0xff]
    %v238 = vld [vmem:[#allocation2 + $0xd8] sm:$0xff]
    %v239 = vld [vmem:[#allocation2 + $0xe0] sm:$0xff]
    %v240 = vld [vmem:[#allocation2 + $0xe8] sm:$0xff]
    %v241 = vld [vmem:[#allocation2 + $0xf0] sm:$0xff]
    %v242 = vld [vmem:[#allocation2 + $0xf8] sm:$0xff]
    %v243 = vld [vmem:[#allocation2 + $0x100] sm:$0xff]
    %v244 = vld [vmem:[#allocation2 + $0x108] sm:$0xff]
    %v245 = vld [vmem:[#allocation2 + $0x110] sm:$0xff]
    %v246 = vld [vmem:[#allocation2 + $0x118] sm:$0xff]
    %v247 = vld [vmem:[#allocation2 + $0x120] sm:$0xff]
    %v248 = vld [vmem:[#allocation2 + $0x128] sm:$0xff]
    %v249 = vld [vmem:[#allocation2 + $0x130] sm:$0xff]
    %v250 = vld [vmem:[#allocation2 + $0x138] sm:$0xff]
    %v251 = vld [vmem:[#allocation2 + $0x140] sm:$0x7]
    %v252 = vlaneseq
    %v253 = vshrl.u32 %v252, 7
    %v254 = vsub.s32 0, %v253
    %v255 = vrot.slane %v251, %v254
    %256 = vmatprep.subr.mxu0 0.0
    %257 = vmatpush1.msra.mxu0 %v250
    %258 = vmatprep.subr.mxu0 0.0
    %259 = vmatpush1.msra.mxu0 %v249
    %260 = vmatprep.subr.mxu0 0.0
    %261 = vmatpush1.msra.mxu0 %v248
    %262 = vmatprep.subr.mxu0 0.0
    %263 = vmatpush1.msra.mxu0 %v247
    %264 = vmatprep.subr.mxu0 0.0
    %265 = vmatpush1.msra.mxu0 %v246
    %266 = vmatprep.subr.mxu0 0.0
    %267 = vmatpush1.msra.mxu0 %v245
    %268 = vmatprep.subr.mxu0 0.0
    %269 = vmatpush1.msra.mxu0 %v244
    %270 = vmatprep.subr.mxu0 0.0
    %271 = vmatpush1.msra.mxu0 %v243
    %272 = vmatprep.subr.mxu0 0.0
    %273 = vmatpush1.msra.mxu0 %v242
    %274 = vmatprep.subr.mxu0 0.0
    %275 = vmatpush1.msra.mxu0 %v241
    %276 = vmatprep.subr.mxu0 0.0
    %277 = vmatpush1.msra.mxu0 %v240
    %278 = vmatprep.subr.mxu0 0.0
    %279 = vmatpush1.msra.mxu0 %v239
    %280 = vmatprep.subr.mxu0 0.0
    %281 = vmatpush1.msra.mxu0 %v238
    %282 = vmatprep.subr.mxu0 0.0
    %283 = vmatpush1.msra.mxu0 %v237
    %284 = vmatprep.subr.mxu0 0.0
    %285 = vmatpush1.msra.mxu0 %v236
    %286 = vmatprep.subr.mxu0 0.0
    %287 = vmatpush1.msra.mxu0 %v235
    %288 = vmatprep.subr.mxu0 0.0
    %289 = vmatpush2.msra.mxu0 0.0
    %290 = vmatprep.subr.mxu0 0.0
    %291 = vmatpush2.msra.mxu0 0.0
    %292 = vmatprep.subr.mxu0 0.0
    %293 = vmatpush2.msra.mxu0 0.0
    %294 = vmatprep.subr.mxu0 0.0
    %295 = vmatpush2.msra.mxu0 0.0
    %296 = vmatprep.subr.mxu0 0.0
    %297 = vmatpush2.msra.mxu0 0.0
    %298 = vmatprep.subr.mxu0 0.0
    %299 = vmatpush2.msra.mxu0 0.0
    %300 = vmatprep.subr.mxu0 0.0
    %301 = vmatpush2.msra.mxu0 0.0
    %302 = vmatprep.subr.mxu0 0.0
    %303 = vmatpush2.msra.mxu0 0.0
    %304 = vmatprep.subr.mxu0 0.0
    %305 = vmatpush2.msra.mxu0 0.0
    %306 = vmatprep.subr.mxu0 0.0
    %307 = vmatpush2.msra.mxu0 0.0
    %308 = vmatprep.subr.mxu0 0.0
    %309 = vmatpush2.msra.mxu0 0.0
    %310 = vmatprep.subr.mxu0 0.0
    %311 = vmatpush2.msra.mxu0 0.0
    %312 = vmatprep.subr.mxu0 0.0
    %313 = vmatpush2.msra.mxu0 0.0
    %314 = vmatprep.subr.mxu0 0.0
    %315 = vmatpush2.msra.mxu0 0.0
    %316 = vmatprep.subr.mxu0 0.0
    %317 = vmatpush2.msra.mxu0 0.0
    %318 = vmatprep.subr.mxu0 0.0
    %319 = vmatpush2.msra.mxu0 0.0
    %320 = vmatprep.mubr.f32.mxu0 0.0
    %321 = vmatmul.mubr.f32.gmra.mxu0 %v234
    %v322 = vpop.f32.mrf.mxu0
    %v323 = vadd.f32 %v255, %v322
    %v324 = vpop.f32.mrf.mxu0
    %325 = vdwg.mxu0
    %v326 = vtanh.pop %v323
    %v327 = vrot.slane %v326, 4
    %v328 = vadd.f32 %v326, %v327
    %v329 = vrot.slane %v328, 2
    %v330 = vadd.f32 %v328, %v329
    %v331 = vrot.slane %v330, 1
    %v332 = vadd.f32 %v330, %v331
    %v333 = vmul.f32 %v332, %v118
    %v334 = vsub.f32 %v326, %v333
    %v335 = vmul.f32 %v334, %v334
    %v336 = vrot.slane %v335, 4
    %v337 = vadd.f32 %v335, %v336
    %v338 = vrot.slane %v337, 2
    %v339 = vadd.f32 %v337, %v338
    %v340 = vrot.slane %v339, 1
    %v341 = vadd.f32 %v339, %v340
    %v342 = vmul.f32 %v341, %v118
    %v343 = vlaneseq
    %v344 = vshrl.u32 %v343, 7
    %v345 = vsub.s32 1, %v344
    %v346 = vrot.slane %v251, %v345
    %v347 = vmul.f32 %v346, %v334
    %v348 = vadd.f32 %v342, 1e-05
    %v349 = vrsqrt.pop %v348
    %v350 = vmul.f32 %v347, %v349
    %v351 = vlaneseq
    %v352 = vshrl.u32 %v351, 7
    %v353 = vsub.s32 2, %v352
    %v354 = vrot.slane %v251, %v353
    %v355 = vadd.f32 %v350, %v354
    %v356 = vadd.f32 %v234, %v355
    %v357 = vld [vmem:[#allocation2 + $0x148] sm:$0xff]
    %v358 = vld [vmem:[#allocation2 + $0x150] sm:$0xff]
    %v359 = vld [vmem:[#allocation2 + $0x158] sm:$0xff]
    %v360 = vld [vmem:[#allocation2 + $0x160] sm:$0xff]
    %v361 = vld [vmem:[#allocation2 + $0x168] sm:$0xff]
    %v362 = vld [vmem:[#allocation2 + $0x170] sm:$0xff]
    %v363 = vld [vmem:[#allocation2 + $0x178] sm:$0xff]
    %v364 = vld [vmem:[#allocation2 + $0x180] sm:$0xff]
    %v365 = vld [vmem:[#allocation2 + $0x188] sm:$0xff]
    %v366 = vld [vmem:[#allocation2 + $0x190] sm:$0xff]
    %v367 = vld [vmem:[#allocation2 + $0x198] sm:$0xff]
    %v368 = vld [vmem:[#allocation2 + $0x1a0] sm:$0xff]
    %v369 = vld [vmem:[#allocation2 + $0x1a8] sm:$0xff]
    %v370 = vld [vmem:[#allocation2 + $0x1b0] sm:$0xff]
    %v371 = vld [vmem:[#allocation2 + $0x1b8] sm:$0xff]
    %v372 = vld [vmem:[#allocation2 + $0x1c0] sm:$0xff]
    %v373 = vld [vmem:[#allocation2 + $0x1c8] sm:$0x7]
    %v374 = vlaneseq
    %v375 = vshrl.u32 %v374, 7
    %v376 = vsub.s32 0, %v375
    %v377 = vrot.slane %v373, %v376
    %378 = vmatprep.subr.mxu0 0.0
    %379 = vmatpush1.msra.mxu0 %v372
    %380 = vmatprep.subr.mxu0 0.0
    %381 = vmatpush1.msra.mxu0 %v371
    %382 = vmatprep.subr.mxu0 0.0
    %383 = vmatpush1.msra.mxu0 %v370
    %384 = vmatprep.subr.mxu0 0.0
    %385 = vmatpush1.msra.mxu0 %v369
    %386 = vmatprep.subr.mxu0 0.0
    %387 = vmatpush1.msra.mxu0 %v368
    %388 = vmatprep.subr.mxu0 0.0
    %389 = vmatpush1.msra.mxu0 %v367
    %390 = vmatprep.subr.mxu0 0.0
    %391 = vmatpush1.msra.mxu0 %v366
    %392 = vmatprep.subr.mxu0 0.0
    %393 = vmatpush1.msra.mxu0 %v365
    %394 = vmatprep.subr.mxu0 0.0
    %395 = vmatpush1.msra.mxu0 %v364
    %396 = vmatprep.subr.mxu0 0.0
    %397 = vmatpush1.msra.mxu0 %v363
    %398 = vmatprep.subr.mxu0 0.0
    %399 = vmatpush1.msra.mxu0 %v362
    %400 = vmatprep.subr.mxu0 0.0
    %401 = vmatpush1.msra.mxu0 %v361
    %402 = vmatprep.subr.mxu0 0.0
    %403 = vmatpush1.msra.mxu0 %v360
    %404 = vmatprep.subr.mxu0 0.0
    %405 = vmatpush1.msra.mxu0 %v359
    %406 = vmatprep.subr.mxu0 0.0
    %407 = vmatpush1.msra.mxu0 %v358
    %408 = vmatprep.subr.mxu0 0.0
    %409 = vmatpush1.msra.mxu0 %v357
    %410 = vmatprep.subr.mxu0 0.0
    %411 = vmatpush2.msra.mxu0 0.0
    %412 = vmatprep.subr.mxu0 0.0
    %413 = vmatpush2.msra.mxu0 0.0
    %414 = vmatprep.subr.mxu0 0.0
    %415 = vmatpush2.msra.mxu0 0.0
    %416 = vmatprep.subr.mxu0 0.0
    %417 = vmatpush2.msra.mxu0 0.0
    %418 = vmatprep.subr.mxu0 0.0
    %419 = vmatpush2.msra.mxu0 0.0
    %420 = vmatprep.subr.mxu0 0.0
    %421 = vmatpush2.msra.mxu0 0.0
    %422 = vmatprep.subr.mxu0 0.0
    %423 = vmatpush2.msra.mxu0 0.0
    %424 = vmatprep.subr.mxu0 0.0
    %425 = vmatpush2.msra.mxu0 0.0
    %426 = vmatprep.subr.mxu0 0.0
    %427 = vmatpush2.msra.mxu0 0.0
    %428 = vmatprep.subr.mxu0 0.0
    %429 = vmatpush2.msra.mxu0 0.0
    %430 = vmatprep.subr.mxu0 0.0
    %431 = vmatpush2.msra.mxu0 0.0
    %432 = vmatprep.subr.mxu0 0.0
    %433 = vmatpush2.msra.mxu0 0.0
    %434 = vmatprep.subr.mxu0 0.0
    %435 = vmatpush2.msra.mxu0 0.0
    %436 = vmatprep.subr.mxu0 0.0
    %437 = vmatpush2.msra.mxu0 0.0
    %438 = vmatprep.subr.mxu0 0.0
    %439 = vmatpush2.msra.mxu0 0.0
    %440 = vmatprep.subr.mxu0 0.0
    %441 = vmatpush2.msra.mxu0 0.0
    %442 = vmatprep.mubr.f32.mxu0 0.0
    %443 = vmatmul.mubr.f32.gmra.mxu0 %v356
    %v444 = vpop.f32.mrf.mxu0
    %v445 = vadd.f32 %v377, %v444
    %v446 = vpop.f32.mrf.mxu0
    %447 = vdwg.mxu0
    %v448 = vtanh.pop %v445
    %v449 = vrot.slane %v448, 4
    %v450 = vadd.f32 %v448, %v449
    %v451 = vrot.slane %v450, 2
    %v452 = vadd.f32 %v450, %v451
    %v453 = vrot.slane %v452, 1
    %v454 = vadd.f32 %v452, %v453
    %v455 = vmul.f32 %v454, %v118
    %v456 = vsub.f32 %v448, %v455
    %v457 = vmul.f32 %v456, %v456
    %v458 = vrot.slane %v457, 4
    %v459 = vadd.f32 %v457, %v458
    %v460 = vrot.slane %v459, 2
    %v461 = vadd.f32 %v459, %v460
    %v462 = vrot.slane %v461, 1
    %v463 = vadd.f32 %v461, %v462
    %v464 = vmul.f32 %v463, %v118
    %v465 = vlaneseq
    %v466 = vshrl.u32 %v465, 7
    %v467 = vsub.s32 1, %v466
    %v468 = vrot.slane %v373, %v467
    %v469 = vmul.f32 %v468, %v456
    %v470 = vadd.f32 %v464, 1e-05
    %v471 = vrsqrt.pop %v470
    %v472 = vmul.f32 %v469, %v471
    %v473 = vlaneseq
    %v474 = vshrl.u32 %v473, 7
    %v475 = vsub.s32 2, %v474
    %v476 = vrot.slane %v373, %v475
    %v477 = vadd.f32 %v472, %v476
    %v478 = vadd.f32 %v356, %v477
    %v479 = vld [vmem:[#allocation2 + $0x1d0] sm:$0xff]
    %v480 = vld [vmem:[#allocation2 + $0x1d8] sm:$0xff]
    %v481 = vld [vmem:[#allocation2 + $0x1e0] sm:$0xff]
    %v482 = vld [vmem:[#allocation2 + $0x1e8] sm:$0xff]
    %v483 = vld [vmem:[#allocation2 + $0x1f0] sm:$0xff]
    %v484 = vld [vmem:[#allocation2 + $0x1f8] sm:$0xff]
    %v485 = vld [vmem:[#allocation2 + $0x200] sm:$0xff]
    %v486 = vld [vmem:[#allocation2 + $0x208] sm:$0xff]
    %v487 = vld [vmem:[#allocation2 + $0x210] sm:$0xff]
    %v488 = vld [vmem:[#allocation2 + $0x218] sm:$0xff]
    %v489 = vld [vmem:[#allocation2 + $0x220] sm:$0xff]
    %v490 = vld [vmem:[#allocation2 + $0x228] sm:$0xff]
    %v491 = vld [vmem:[#allocation2 + $0x230] sm:$0xff]
    %v492 = vld [vmem:[#allocation2 + $0x238] sm:$0xff]
    %v493 = vld [vmem:[#allocation2 + $0x240] sm:$0xff]
    %v494 = vld [vmem:[#allocation2 + $0x248] sm:$0xff]
    %v495 = vld [vmem:[#allocation2 + $0x250] sm:$0x7]
    %v496 = vlaneseq
    %v497 = vshrl.u32 %v496, 7
    %v498 = vsub.s32 0, %v497
    %v499 = vrot.slane %v495, %v498
    %500 = vmatprep.subr.mxu0 0.0
    %501 = vmatpush1.msra.mxu0 %v494
    %502 = vmatprep.subr.mxu0 0.0
    %503 = vmatpush1.msra.mxu0 %v493
    %504 = vmatprep.subr.mxu0 0.0
    %505 = vmatpush1.msra.mxu0 %v492
    %506 = vmatprep.subr.mxu0 0.0
    %507 = vmatpush1.msra.mxu0 %v491
    %508 = vmatprep.subr.mxu0 0.0
    %509 = vmatpush1.msra.mxu0 %v490
    %510 = vmatprep.subr.mxu0 0.0
    %511 = vmatpush1.msra.mxu0 %v489
    %512 = vmatprep.subr.mxu0 0.0
    %513 = vmatpush1.msra.mxu0 %v488
    %514 = vmatprep.subr.mxu0 0.0
    %515 = vmatpush1.msra.mxu0 %v487
    %516 = vmatprep.subr.mxu0 0.0
    %517 = vmatpush1.msra.mxu0 %v486
    %518 = vmatprep.subr.mxu0 0.0
    %519 = vmatpush1.msra.mxu0 %v485
    %520 = vmatprep.subr.mxu0 0.0
    %521 = vmatpush1.msra.mxu0 %v484
    %522 = vmatprep.subr.mxu0 0.0
    %523 = vmatpush1.msra.mxu0 %v483
    %524 = vmatprep.subr.mxu0 0.0
    %525 = vmatpush1.msra.mxu0 %v482
    %526 = vmatprep.subr.mxu0 0.0
    %527 = vmatpush1.msra.mxu0 %v481
    %528 = vmatprep.subr.mxu0 0.0
    %529 = vmatpush1.msra.mxu0 %v480
    %530 = vmatprep.subr.mxu0 0.0
    %531 = vmatpush1.msra.mxu0 %v479
    %532 = vmatprep.subr.mxu0 0.0
    %533 = vmatpush2.msra.mxu0 0.0
    %534 = vmatprep.subr.mxu0 0.0
    %535 = vmatpush2.msra.mxu0 0.0
    %536 = vmatprep.subr.mxu0 0.0
    %537 = vmatpush2.msra.mxu0 0.0
    %538 = vmatprep.subr.mxu0 0.0
    %539 = vmatpush2.msra.mxu0 0.0
    %540 = vmatprep.subr.mxu0 0.0
    %541 = vmatpush2.msra.mxu0 0.0
    %542 = vmatprep.subr.mxu0 0.0
    %543 = vmatpush2.msra.mxu0 0.0
    %544 = vmatprep.subr.mxu0 0.0
    %545 = vmatpush2.msra.mxu0 0.0
    %546 = vmatprep.subr.mxu0 0.0
    %547 = vmatpush2.msra.mxu0 0.0
    %548 = vmatprep.subr.mxu0 0.0
    %549 = vmatpush2.msra.mxu0 0.0
    %550 = vmatprep.subr.mxu0 0.0
    %551 = vmatpush2.msra.mxu0 0.0
    %552 = vmatprep.subr.mxu0 0.0
    %553 = vmatpush2.msra.mxu0 0.0
    %554 = vmatprep.subr.mxu0 0.0
    %555 = vmatpush2.msra.mxu0 0.0
    %556 = vmatprep.subr.mxu0 0.0
    %557 = vmatpush2.msra.mxu0 0.0
    %558 = vmatprep.subr.mxu0 0.0
    %559 = vmatpush2.msra.mxu0 0.0
    %560 = vmatprep.subr.mxu0 0.0
    %561 = vmatpush2.msra.mxu0 0.0
    %562 = vmatprep.subr.mxu0 0.0
    %563 = vmatpush2.msra.mxu0 0.0
    %564 = vmatprep.mubr.f32.mxu0 0.0
    %565 = vmatmul.mubr.f32.gmra.mxu0 %v478
    %v566 = vpop.f32.mrf.mxu0
    %v567 = vadd.f32 %v499, %v566
    %v568 = vpop.f32.mrf.mxu0
    %569 = vdwg.mxu0
    %v570 = vtanh.pop %v567
    %v571 = vrot.slane %v570, 4
    %v572 = vadd.f32 %v570, %v571
    %v573 = vrot.slane %v572, 2
    %v574 = vadd.f32 %v572, %v573
    %v575 = vrot.slane %v574, 1
    %v576 = vadd.f32 %v574, %v575
    %v577 = vmul.f32 %v576, %v118
    %v578 = vsub.f32 %v570, %v577
    %v579 = vmul.f32 %v578, %v578
    %v580 = vrot.slane %v579, 4
    %v581 = vadd.f32 %v579, %v580
    %v582 = vrot.slane %v581, 2
    %v583 = vadd.f32 %v581, %v582
    %v584 = vrot.slane %v583, 1
    %v585 = vadd.f32 %v583, %v584
    %v586 = vmul.f32 %v585, %v118
    %v587 = vlaneseq
    %v588 = vshrl.u32 %v587, 7
    %v589 = vsub.s32 1, %v588
    %v590 = vrot.slane %v495, %v589
    %v591 = vmul.f32 %v590, %v578
    %v592 = vadd.f32 %v586, 1e-05
    %v593 = vrsqrt.pop %v592
    %v594 = vmul.f32 %v591, %v593
    %v595 = vlaneseq
    %v596 = vshrl.u32 %v595, 7
    %v597 = vsub.s32 2, %v596
    %v598 = vrot.slane %v495, %v597
    %v599 = vadd.f32 %v594, %v598
    %v600 = vadd.f32 %v478, %v599
    %v601 = vld [vmem:[#allocation2 + $0x258] sm:$0xff]
    %v602 = vld [vmem:[#allocation2 + $0x260] sm:$0xff]
    %v603 = vld [vmem:[#allocation2 + $0x268] sm:$0xff]
    %v604 = vld [vmem:[#allocation2 + $0x270] sm:$0xff]
    %v605 = vld [vmem:[#allocation2 + $0x278] sm:$0xff]
    %v606 = vld [vmem:[#allocation2 + $0x280] sm:$0xff]
    %v607 = vld [vmem:[#allocation2 + $0x288] sm:$0xff]
    %v608 = vld [vmem:[#allocation2 + $0x290] sm:$0xff]
    %v609 = vld [vmem:[#allocation2 + $0x298] sm:$0xff]
    %v610 = vld [vmem:[#allocation2 + $0x2a0] sm:$0xff]
    %v611 = vld [vmem:[#allocation2 + $0x2a8] sm:$0xff]
    %v612 = vld [vmem:[#allocation2 + $0x2b0] sm:$0xff]
    %v613 = vld [vmem:[#allocation2 + $0x2b8] sm:$0xff]
    %v614 = vld [vmem:[#allocation2 + $0x2c0] sm:$0xff]
    %v615 = vld [vmem:[#allocation2 + $0x2c8] sm:$0xff]
    %v616 = vld [vmem:[#allocation2 + $0x2d0] sm:$0xff]
    %v617 = vld [vmem:[#allocation2 + $0x2d8] sm:$0x7]
    %v618 = vlaneseq
    %v619 = vshrl.u32 %v618, 7
    %v620 = vsub.s32 0, %v619
    %v621 = vrot.slane %v617, %v620
    %622 = vmatprep.subr.mxu0 0.0
    %623 = vmatpush1.msra.mxu0 %v616
    %624 = vmatprep.subr.mxu0 0.0
    %625 = vmatpush1.msra.mxu0 %v615
    %626 = vmatprep.subr.mxu0 0.0
    %627 = vmatpush1.msra.mxu0 %v614
    %628 = vmatprep.subr.mxu0 0.0
    %629 = vmatpush1.msra.mxu0 %v613
    %630 = vmatprep.subr.mxu0 0.0
    %631 = vmatpush1.msra.mxu0 %v612
    %632 = vmatprep.subr.mxu0 0.0
    %633 = vmatpush1.msra.mxu0 %v611
    %634 = vmatprep.subr.mxu0 0.0
    %635 = vmatpush1.msra.mxu0 %v610
    %636 = vmatprep.subr.mxu0 0.0
    %637 = vmatpush1.msra.mxu0 %v609
    %638 = vmatprep.subr.mxu0 0.0
    %639 = vmatpush1.msra.mxu0 %v608
    %640 = vmatprep.subr.mxu0 0.0
    %641 = vmatpush1.msra.mxu0 %v607
    %642 = vmatprep.subr.mxu0 0.0
    %643 = vmatpush1.msra.mxu0 %v606
    %644 = vmatprep.subr.mxu0 0.0
    %645 = vmatpush1.msra.mxu0 %v605
    %646 = vmatprep.subr.mxu0 0.0
    %647 = vmatpush1.msra.mxu0 %v604
    %648 = vmatprep.subr.mxu0 0.0
    %649 = vmatpush1.msra.mxu0 %v603
    %650 = vmatprep.subr.mxu0 0.0
    %651 = vmatpush1.msra.mxu0 %v602
    %652 = vmatprep.subr.mxu0 0.0
    %653 = vmatpush1.msra.mxu0 %v601
    %654 = vmatprep.subr.mxu0 0.0
    %655 = vmatpush2.msra.mxu0 0.0
    %656 = vmatprep.subr.mxu0 0.0
    %657 = vmatpush2.msra.mxu0 0.0
    %658 = vmatprep.subr.mxu0 0.0
    %659 = vmatpush2.msra.mxu0 0.0
    %660 = vmatprep.subr.mxu0 0.0
    %661 = vmatpush2.msra.mxu0 0.0
    %662 = vmatprep.subr.mxu0 0.0
    %663 = vmatpush2.msra.mxu0 0.0
    %664 = vmatprep.subr.mxu0 0.0
    %665 = vmatpush2.msra.mxu0 0.0
    %666 = vmatprep.subr.mxu0 0.0
    %667 = vmatpush2.msra.mxu0 0.0
    %668 = vmatprep.subr.mxu0 0.0
    %669 = vmatpush2.msra.mxu0 0.0
    %670 = vmatprep.subr.mxu0 0.0
    %671 = vmatpush2.msra.mxu0 0.0
    %672 = vmatprep.subr.mxu0 0.0
    %673 = vmatpush2.msra.mxu0 0.0
    %674 = vmatprep.subr.mxu0 0.0
    %675 = vmatpush2.msra.mxu0 0.0
    %676 = vmatprep.subr.mxu0 0.0
    %677 = vmatpush2.msra.mxu0 0.0
    %678 = vmatprep.subr.mxu0 0.0
    %679 = vmatpush2.msra.mxu0 0.0
    %680 = vmatprep.subr.mxu0 0.0
    %681 = vmatpush2.msra.mxu0 0.0
    %682 = vmatprep.subr.mxu0 0.0
    %683 = vmatpush2.msra.mxu0 0.0
    %684 = vmatprep.subr.mxu0 0.0
    %685 = vmatpush2.msra.mxu0 0.0
    %686 = vmatprep.mubr.f32.mxu0 0.0
    %687 = vmatmul.mubr.f32.gmra.mxu0 %v600
    %v688 = vpop.f32.mrf.mxu0
    %v689 = vadd.f32 %v621, %v688
    %v690 = vpop.f32.mrf.mxu0
    %691 = vdwg.mxu0
    %v692 = vtanh.pop %v689
    %v693 = vlaneseq
    %v694 = vshrl.u32 %v693, 7
    %v695 = vsub.s32 1, %v694
    %v696 = vrot.slane %v617, %v695
    %v697 = vmul.f32 %v692, %v696
    %v698 = vadd.f32 %v600, %v697
    %v699 = vlaneseq
    %v700 = vshrl.u32 %v699, 7
    %v701 = vsub.s32 2, %v700
    %v702 = vrot.slane %v617, %v701
    %v703 = vadd.f32 %v698, %v702
    %704 = vst [vmem:[%s2] sm:$0xff] %v703
    // Predicated region
    $region14: #{forward_pallas.1} parent=1 // pred_check
      _
    $region15: #{forward_pallas.1} parent=1 // pred_check_branch
      %706 = sbr.rel (0) target = $region17
    $region16: #{forward_pallas.1} parent=1 // pred_region
      _
    $region17: #{forward_pallas.1} parent=1 // pred_fallthru
      _
    // Predicated region
    $region18: #{forward_pallas.1} parent=1 // pred_check
      _
    $region19: #{forward_pallas.1} parent=1 // pred_check_branch
      %708 = sbr.rel (0) target = $region21
    $region20: #{forward_pallas.1} parent=1 // pred_region
      _
    $region21: #{forward_pallas.1} parent=1 // pred_fallthru
      _
    %709 = vsyncpa [#allocation3], 1

</llo_original>
